<compile_context>
chip_gen: v7x
topology: tpu7x:2x2x1
jax: 0.10.0
libtpu: 0.0.40
codegen_flags: <defaults>
</compile_context>

<pallas_src>
import jax
import jax.numpy as jnp
from jax.experimental import pallas as pl
from jax.experimental.pallas import tpu as pltpu


def qnetwork_kernel(state_ref, action_ref, w1s_ref, w1a_ref, b1_ref,
                    w2_ref, b2_ref, w3_ref, b3_ref, out_ref):
    # All activations are (features, TB): batch on the lane axis -> dense vregs.
    mm_dtype = w1s_ref.dtype                      # f32 or bf16 matmul operands

    s = state_ref[...]                            # (S, TB), already mm_dtype
    a = action_ref[...]                           # (A, TB)

    # layer 1: W1s^T @ s + W1a^T @ a + b1 -> relu   (concat fused away)
    h1 = jnp.dot(w1s_ref[...], s, preferred_element_type=jnp.float32)
    h1 = h1 + jnp.dot(w1a_ref[...], a, preferred_element_type=jnp.float32)
    h1 = jnp.maximum(h1 + b1_ref[...], 0.0)       # (H, TB), f32 epilogue

    # layer 2: W2^T @ h1 + b2 -> relu
    h2 = jnp.dot(w2_ref[...], h1.astype(mm_dtype),
                 preferred_element_type=jnp.float32)
    h2 = jnp.maximum(h2 + b2_ref[...], 0.0)       # (H, TB), f32 epilogue

    # layer 3: W3^T @ h2 -> (1, TB) lane-dense q row; b3 is an SMEM scalar
    q = jnp.dot(w3_ref[...], h2.astype(mm_dtype),
                preferred_element_type=jnp.float32)
    out_ref[...] = (q + b3_ref[0]).astype(out_ref.dtype)


def _pick_batch_tile(batch, block_b):
    """Lane-axis (batch) tile: a multiple of 128 unless it covers the whole
    batch; for moderate batches guarantee >= 2 grid steps (v7x megacore)."""
    if batch > block_b:
        return max(128, (block_b // 128) * 128)
    if batch >= 256:
        half = (((batch + 1) // 2) + 127) // 128 * 128
        return min(batch, half)
    return batch


def qnetwork_forward(state, action, params, *, block_b=512, matmul_dtype=None):
    """Pallas implementation of QNetwork.forward(state, action) -> (B, 1)."""
    B, S = state.shape
    _, A = action.shape
    w1, b1, w2, b2, w3, b3 = params               # w1 (S+A,H) ... w3 (H,1)
    H = w1.shape[1]

    mm_dtype = jnp.float32 if matmul_dtype is None else matmul_dtype

    # Trace-time weight prep (replaces the concat; puts batch on the lane axis).
    w1s_t = w1[:S].T.astype(mm_dtype)             # (H, S)
    w1a_t = w1[S:].T.astype(mm_dtype)             # (H, A)
    w2_t = w2.T.astype(mm_dtype)                  # (H, H)
    w3_row = w3.reshape(1, H).astype(mm_dtype)    # (1, H)  (== w3.T)
    b1_col = b1.reshape(H, 1)                     # (H, 1), f32
    b2_col = b2.reshape(H, 1)                     # (H, 1), f32
    b3_s = b3.reshape(1)                          # (1,),   f32, goes to SMEM

    # Transpose activations once in the wrapper; the bf16 cast fuses with it.
    state_t = state.T.astype(mm_dtype)            # (S, B)
    action_t = action.T.astype(mm_dtype)          # (A, B)

    tb = _pick_batch_tile(B, block_b)
    grid = (pl.cdiv(B, tb),)

    lane_in = lambda d: pl.BlockSpec((d, tb), lambda i: (0, i))
    resident = lambda shape: pl.BlockSpec(shape, lambda i: (0, 0))

    act_bytes = jnp.dtype(mm_dtype).itemsize
    flops = 2 * B * ((S + A) * H + H * H + H)
    bytes_accessed = int(B * (S + A) * act_bytes                 # activations
                         + ((S + A) * H + H * H + H) * act_bytes  # weights
                         + (2 * H + 1) * 4                        # biases
                         + B * 4)                                 # q out

    q_row = pl.pallas_call(
        qnetwork_kernel,
        out_shape=jax.ShapeDtypeStruct((1, B), jnp.float32),
        grid=grid,
        in_specs=[
            lane_in(S),                           # state^T   (S, TB)
            lane_in(A),                           # action^T  (A, TB)
            resident((H, S)),                     # W1_s^T    (VMEM resident)
            resident((H, A)),                     # W1_a^T
            resident((H, 1)),                     # b1 (f32)
            resident((H, H)),                     # W2^T
            resident((H, 1)),                     # b2 (f32)
            resident((1, H)),                     # W3 row
            pl.BlockSpec(memory_space=pltpu.MemorySpace.SMEM),   # b3 scalar
        ],
        out_specs=pl.BlockSpec((1, tb), lambda i: (0, i)),   # lane-dense q row
        compiler_params=pltpu.CompilerParams(
            dimension_semantics=("parallel",)),
        cost_estimate=pl.CostEstimate(flops=flops, transcendentals=0,
                                      bytes_accessed=bytes_accessed),
    )(state_t, action_t, w1s_t, w1a_t, b1_col, w2_t, b2_col, w3_row, b3_s)

    # (1, B) -> (B, 1): small relayout, kept only to match the module signature.
    return q_row.reshape(B, 1)


def init_qnetwork_params(key, input_dim, hidden_dim, init_w=0.003):
    """Deterministic init mirroring the PyTorch module's __init__.

    linear1/linear2: PyTorch default U(-1/sqrt(fan_in), 1/sqrt(fan_in))
    linear3:         U(-init_w, init_w) for both weight and bias
    Weights are stored (in_features, out_features) so the math is x @ W + b.
    """
    k = jax.random.split(key, 6)
    bound1 = 1.0 / jnp.sqrt(jnp.float32(input_dim))
    bound2 = 1.0 / jnp.sqrt(jnp.float32(hidden_dim))

    w1 = jax.random.uniform(k[0], (input_dim, hidden_dim), jnp.float32,
                            -bound1, bound1)
    b1 = jax.random.uniform(k[1], (1, hidden_dim), jnp.float32,
                            -bound1, bound1)
    w2 = jax.random.uniform(k[2], (hidden_dim, hidden_dim), jnp.float32,
                            -bound2, bound2)
    b2 = jax.random.uniform(k[3], (1, hidden_dim), jnp.float32,
                            -bound2, bound2)
    w3 = jax.random.uniform(k[4], (hidden_dim, 1), jnp.float32,
                            -init_w, init_w)
    b3 = jax.random.uniform(k[5], (1, 1), jnp.float32, -init_w, init_w)
    return (w1, b1, w2, b2, w3, b3)


def qnetwork_ref(state, action, params):
    """Pure-JAX reference for correctness check."""
    w1, b1, w2, b2, w3, b3 = params
    x = jnp.concatenate([state, action], axis=1)
    x = jnp.maximum(x @ w1 + b1, 0.0)
    x = jnp.maximum(x @ w2 + b2, 0.0)
    return x @ w3 + b3


if __name__ == "__main__":
    # Small shapes consistent with a DDPG critic:
    #   state_dim=6, action_dim=2 -> input_dim=8, hidden_dim=32, batch=8
    batch, state_dim, action_dim, hidden_dim = 8, 6, 2, 32
    input_dim = state_dim + action_dim

    key = jax.random.PRNGKey(0)
    k_state, k_action, k_params, k_big = jax.random.split(key, 4)

    state = jax.random.normal(k_state, (batch, state_dim), jnp.float32)
    action = jax.random.normal(k_action, (batch, action_dim), jnp.float32)
    params = init_qnetwork_params(k_params, input_dim, hidden_dim)

    q_ref = qnetwork_ref(state, action, params)

    # f32 matmul path (matches the reference)
    q = qnetwork_forward(state, action, params)
    jax.block_until_ready(q)
    assert q.shape == (batch, 1)
    assert jnp.allclose(q, q_ref, atol=1e-5, rtol=1e-5)

    # bf16-operand MXU path (f32 accumulation + f32 epilogue), looser tolerance
    q_bf16 = qnetwork_forward(state, action, params, matmul_dtype=jnp.bfloat16)
    jax.block_until_ready(q_bf16)
    assert jnp.allclose(q_bf16, q_ref, atol=2e-2, rtol=2e-2)

    # Moderate batch: exercises the multi-step, lane-tiled grid (2 steps,
    # partial last block) that v7x megacore sharding relies on.
    big_b = 300
    kb1, kb2 = jax.random.split(k_big)
    state_b = jax.random.normal(kb1, (big_b, state_dim), jnp.float32)
    action_b = jax.random.normal(kb2, (big_b, action_dim), jnp.float32)
    q_big = qnetwork_forward(state_b, action_b, params)
    jax.block_until_ready(q_big)
    assert q_big.shape == (big_b, 1)
    assert jnp.allclose(q_big, qnetwork_ref(state_b, action_b, params),
                        atol=1e-5, rtol=1e-5)

    print("KERNEL_OK")
</pallas_src>

<mosaic_0001>
module attributes {stable_mosaic.version = 11 : i64} {
  func.func @qnetwork_kernel(%arg0: i32, %arg1: memref<6x8xf32, #tpu.memory_space<vmem>>, %arg2: memref<2x8xf32, #tpu.memory_space<vmem>>, %arg3: memref<32x6xf32, #tpu.memory_space<vmem>>, %arg4: memref<32x2xf32, #tpu.memory_space<vmem>>, %arg5: memref<32x1xf32, #tpu.memory_space<vmem>>, %arg6: memref<32x32xf32, #tpu.memory_space<vmem>>, %arg7: memref<32x1xf32, #tpu.memory_space<vmem>>, %arg8: memref<1x32xf32, #tpu.memory_space<vmem>>, %arg9: memref<1xf32, #tpu.memory_space<smem>>, %arg10: memref<1x8xf32, #tpu.memory_space<vmem>>) attributes {dimension_semantics = [#tpu.dimension_semantics<parallel>], iteration_bounds = array<i64: 1>, scalar_prefetch = 0 : i64, scratch_operands = 0 : i64, tpu.core_type = #tpu.core_type<tc>, window_params = [{transform_indices = @transform_0, window_bounds = array<i64: 6, 8>}, {transform_indices = @transform_1, window_bounds = array<i64: 2, 8>}, {pipeline_mode = #tpu.pipeline_mode<synchronous>, transform_indices = @transform_2, window_bounds = array<i64: 32, 6>}, {pipeline_mode = #tpu.pipeline_mode<synchronous>, transform_indices = @transform_3, window_bounds = array<i64: 32, 2>}, {pipeline_mode = #tpu.pipeline_mode<synchronous>, transform_indices = @transform_4, window_bounds = array<i64: 32, 1>}, {pipeline_mode = #tpu.pipeline_mode<synchronous>, transform_indices = @transform_5, window_bounds = array<i64: 32, 32>}, {pipeline_mode = #tpu.pipeline_mode<synchronous>, transform_indices = @transform_6, window_bounds = array<i64: 32, 1>}, {pipeline_mode = #tpu.pipeline_mode<synchronous>, transform_indices = @transform_7, window_bounds = array<i64: 1, 32>}, {transform_indices = @transform_8, window_bounds = array<i64: 1>}, {transform_indices = @transform_9, window_bounds = array<i64: 1, 8>}]} {
    %c0 = arith.constant 0 : index
    %c0_0 = arith.constant 0 : index
    %0 = vector.load %arg1[%c0, %c0_0] : memref<6x8xf32, #tpu.memory_space<vmem>>, vector<6x8xf32>
    %c0_1 = arith.constant 0 : index
    %c0_2 = arith.constant 0 : index
    %1 = vector.load %arg2[%c0_1, %c0_2] : memref<2x8xf32, #tpu.memory_space<vmem>>, vector<2x8xf32>
    %c0_3 = arith.constant 0 : index
    %c0_4 = arith.constant 0 : index
    %2 = vector.load %arg3[%c0_3, %c0_4] : memref<32x6xf32, #tpu.memory_space<vmem>>, vector<32x6xf32>
    %cst = arith.constant dense<0.000000e+00> : vector<32x8xf32>
    %3 = tpu.matmul %2, %0, %cst {dimension_numbers = #tpu.dot_dimension_numbers<[1], [0], [0], [1], [0, 0, 1, 1], [], []>} : vector<32x6xf32>, vector<6x8xf32>, vector<32x8xf32> -> vector<32x8xf32>
    %c0_5 = arith.constant 0 : index
    %c0_6 = arith.constant 0 : index
    %4 = vector.load %arg4[%c0_5, %c0_6] : memref<32x2xf32, #tpu.memory_space<vmem>>, vector<32x2xf32>
    %cst_7 = arith.constant dense<0.000000e+00> : vector<32x8xf32>
    %5 = tpu.matmul %4, %1, %cst_7 {dimension_numbers = #tpu.dot_dimension_numbers<[1], [0], [0], [1], [0, 0, 1, 1], [], []>} : vector<32x2xf32>, vector<2x8xf32>, vector<32x8xf32> -> vector<32x8xf32>
    %6 = arith.addf %3, %5 : vector<32x8xf32>
    %c0_8 = arith.constant 0 : index
    %c0_9 = arith.constant 0 : index
    %7 = vector.load %arg5[%c0_8, %c0_9] : memref<32x1xf32, #tpu.memory_space<vmem>>, vector<32x1xf32>
    %8 = vector.broadcast %7 : vector<32x1xf32> to vector<32x8xf32>
    %9 = arith.addf %6, %8 : vector<32x8xf32>
    %cst_10 = arith.constant 0.000000e+00 : f32
    %10 = vector.broadcast %cst_10 : f32 to vector<32x8xf32>
    %11 = arith.maximumf %9, %10 : vector<32x8xf32>
    %c0_11 = arith.constant 0 : index
    %c0_12 = arith.constant 0 : index
    %12 = vector.load %arg6[%c0_11, %c0_12] : memref<32x32xf32, #tpu.memory_space<vmem>>, vector<32x32xf32>
    %cst_13 = arith.constant dense<0.000000e+00> : vector<32x8xf32>
    %13 = tpu.matmul %12, %11, %cst_13 {dimension_numbers = #tpu.dot_dimension_numbers<[1], [0], [0], [1], [0, 0, 1, 1], [], []>} : vector<32x32xf32>, vector<32x8xf32>, vector<32x8xf32> -> vector<32x8xf32>
    %c0_14 = arith.constant 0 : index
    %c0_15 = arith.constant 0 : index
    %14 = vector.load %arg7[%c0_14, %c0_15] : memref<32x1xf32, #tpu.memory_space<vmem>>, vector<32x1xf32>
    %15 = vector.broadcast %14 : vector<32x1xf32> to vector<32x8xf32>
    %16 = arith.addf %13, %15 : vector<32x8xf32>
    %cst_16 = arith.constant 0.000000e+00 : f32
    %17 = vector.broadcast %cst_16 : f32 to vector<32x8xf32>
    %18 = arith.maximumf %16, %17 : vector<32x8xf32>
    %c0_17 = arith.constant 0 : index
    %c0_18 = arith.constant 0 : index
    %19 = vector.load %arg8[%c0_17, %c0_18] : memref<1x32xf32, #tpu.memory_space<vmem>>, vector<1x32xf32>
    %cst_19 = arith.constant dense<0.000000e+00> : vector<1x8xf32>
    %20 = tpu.matmul %19, %18, %cst_19 {dimension_numbers = #tpu.dot_dimension_numbers<[1], [0], [0], [1], [0, 0, 1, 1], [], []>} : vector<1x32xf32>, vector<32x8xf32>, vector<1x8xf32> -> vector<1x8xf32>
    %c0_20 = arith.constant 0 : index
    %21 = memref.load %arg9[%c0_20] : memref<1xf32, #tpu.memory_space<smem>>
    %22 = vector.broadcast %21 : f32 to vector<1x8xf32>
    %23 = arith.addf %20, %22 : vector<1x8xf32>
    %c0_21 = arith.constant 0 : index
    %c0_22 = arith.constant 0 : index
    %24 = vector.load %arg10[%c0_21, %c0_22] : memref<1x8xf32, #tpu.memory_space<vmem>>, vector<1x8xf32>
    tpu.vector_store %arg10[%c0_21, %c0_22], %23 {strides = array<i32>} : memref<1x8xf32, #tpu.memory_space<vmem>>, vector<1x8xf32>,
    return
  }
  func.func @transform_0(%arg0: i32) -> (i32, i32) {
    %c0_i32 = arith.constant 0 : i32
    %c0_i32_0 = arith.constant 0 : i32
    return %c0_i32, %arg0 : i32, i32
  }
  func.func @transform_1(%arg0: i32) -> (i32, i32) {
    %c0_i32 = arith.constant 0 : i32
    %c0_i32_0 = arith.constant 0 : i32
    return %c0_i32, %arg0 : i32, i32
  }
  func.func @transform_2(%arg0: i32) -> (i32, i32) {
    %c0_i32 = arith.constant 0 : i32
    %c0_i32_0 = arith.constant 0 : i32
    %c0_i32_1 = arith.constant 0 : i32
    return %c0_i32, %c0_i32_0 : i32, i32
  }
  func.func @transform_3(%arg0: i32) -> (i32, i32) {
    %c0_i32 = arith.constant 0 : i32
    %c0_i32_0 = arith.constant 0 : i32
    %c0_i32_1 = arith.constant 0 : i32
    return %c0_i32, %c0_i32_0 : i32, i32
  }
  func.func @transform_4(%arg0: i32) -> (i32, i32) {
    %c0_i32 = arith.constant 0 : i32
    %c0_i32_0 = arith.constant 0 : i32
    %c0_i32_1 = arith.constant 0 : i32
    return %c0_i32, %c0_i32_0 : i32, i32
  }
  func.func @transform_5(%arg0: i32) -> (i32, i32) {
    %c0_i32 = arith.constant 0 : i32
    %c0_i32_0 = arith.constant 0 : i32
    %c0_i32_1 = arith.constant 0 : i32
    return %c0_i32, %c0_i32_0 : i32, i32
  }
  func.func @transform_6(%arg0: i32) -> (i32, i32) {
    %c0_i32 = arith.constant 0 : i32
    %c0_i32_0 = arith.constant 0 : i32
    %c0_i32_1 = arith.constant 0 : i32
    return %c0_i32, %c0_i32_0 : i32, i32
  }
  func.func @transform_7(%arg0: i32) -> (i32, i32) {
    %c0_i32 = arith.constant 0 : i32
    %c0_i32_0 = arith.constant 0 : i32
    %c0_i32_1 = arith.constant 0 : i32
    return %c0_i32, %c0_i32_0 : i32, i32
  }
  func.func @transform_8(%arg0: i32) -> i32 {
    %c0_i32 = arith.constant 0 : i32
    %c0_i32_0 = arith.constant 0 : i32
    return %c0_i32 : i32
  }
  func.func @transform_9(%arg0: i32) -> (i32, i32) {
    %c0_i32 = arith.constant 0 : i32
    %c0_i32_0 = arith.constant 0 : i32
    return %c0_i32, %arg0 : i32, i32
  }
}

</mosaic_0001>

<llo_original>
// kernel: tpu_custom_call.1
$region0: #{tpu_custom_call.1}
  #allocation0 [shape = 'u32[]', space=smem, size = 0x4, offset = 0x4, fixed_abs, tag = 'smem constant byte address 0x4 - core index']
  #allocation1 [shape = 'u32[144,128]{1,0:T(1,128)}', space=vmem, size = 0x12000, scoped, tag = 'internal scratch']
  #allocation2 [shape = 'f32[1]{0:T(128)S(6)}', space=smem, size = 0x200, scoped, tag = 'scoped memory for tpu_custom_call.1']
  %s0 = inlined_call_operand.vmem [shape: f32[6,8], index: 0, kind: input, shape index: {}]
  %s1 = inlined_call_operand.vmem [shape: f32[2,8], index: 1, kind: input, shape index: {}]
  %s2 = inlined_call_operand.vmem [shape: f32[32,6], index: 2, kind: input, shape index: {}]
  %s3 = inlined_call_operand.vmem [shape: f32[32,2], index: 3, kind: input, shape index: {}]
  %s4 = inlined_call_operand.vmem [shape: f32[32,1], index: 4, kind: input, shape index: {}]
  %s5 = inlined_call_operand.vmem [shape: f32[32,32], index: 5, kind: input, shape index: {}]
  %s6 = inlined_call_operand.vmem [shape: f32[32,1], index: 6, kind: input, shape index: {}]
  %s7 = inlined_call_operand.vmem [shape: f32[1,32], index: 7, kind: input, shape index: {}]
  %s8 = inlined_call_operand.<no memory space> [shape: f32[1], index: 8, kind: input, shape index: {}]
  %s9 = inlined_call_operand.hbm [shape: f32[1,8], index: 9, kind: output, shape index: {}]
  %s10 = sld [smem:[#allocation0]]
  $region46: #{tpu_custom_call.1} parent=0
    _
  %s12 = ssub.s32 1, %s10
  %s13 = scalar_select 0, %s12, %s10
  %14 = sst [smem:[#allocation2]] %s8
  $region1: #{tpu_custom_call.1} parent=0
    #allocation3 [shape = 'u8[512]{0}', space=vmem, size = 0x400, scoped, tag = 'output window, operand 0, single buffered']
    #allocation4 [shape = 's32[1]{0}', space=sflag, size = 0x4, scoped, tag = 'scoped memory for tpu_custom_call.1']
    %15 = vsyncpa [#allocation4], 0
    // Predicated region
    $region2: #{tpu_custom_call.1} parent=1 // pred_check
      _
    $region3: #{tpu_custom_call.1} parent=1 // pred_check_branch
      %17 = sbr.rel (0) target = $region5
    $region4: #{tpu_custom_call.1} parent=1 // pred_region
      _
    $region5: #{tpu_custom_call.1} parent=1 // pred_fallthru
      _
    // Predicated region
    $region6: #{tpu_custom_call.1} parent=1 // pred_check
      _
    $region7: #{tpu_custom_call.1} parent=1 // pred_check_branch
      %19 = sbr.rel (0) target = $region9
    $region8: #{tpu_custom_call.1} parent=1 // pred_region
      _
    $region9: #{tpu_custom_call.1} parent=1 // pred_fallthru
      _
    // Predicated region
    $region10: #{tpu_custom_call.1} parent=1 // pred_check
      _
    $region11: #{tpu_custom_call.1} parent=1 // pred_check_branch
      %21 = sbr.rel (0) target = $region13
    $region12: #{tpu_custom_call.1} parent=1 // pred_region
      _
    $region13: #{tpu_custom_call.1} parent=1 // pred_fallthru
      _
    // Predicated region
    $region14: #{tpu_custom_call.1} parent=1 // pred_check
      _
    $region15: #{tpu_custom_call.1} parent=1 // pred_check_branch
      %23 = sbr.rel (0) target = $region17
    $region16: #{tpu_custom_call.1} parent=1 // pred_region
      _
    $region17: #{tpu_custom_call.1} parent=1 // pred_fallthru
      _
    // Predicated region
    $region18: #{tpu_custom_call.1} parent=1 // pred_check
      _
    $region19: #{tpu_custom_call.1} parent=1 // pred_check_branch
      %25 = sbr.rel (0) target = $region21
    $region20: #{tpu_custom_call.1} parent=1 // pred_region
      _
    $region21: #{tpu_custom_call.1} parent=1 // pred_fallthru
      _
    // Predicated region
    $region22: #{tpu_custom_call.1} parent=1 // pred_check
      _
    $region23: #{tpu_custom_call.1} parent=1 // pred_check_branch
      %27 = sbr.rel (0) target = $region25
    $region24: #{tpu_custom_call.1} parent=1 // pred_region
      _
    $region25: #{tpu_custom_call.1} parent=1 // pred_fallthru
      _
    // Predicated region
    $region26: #{tpu_custom_call.1} parent=1 // pred_check
      _
    $region27: #{tpu_custom_call.1} parent=1 // pred_check_branch
      %29 = sbr.rel (0) target = $region29
    $region28: #{tpu_custom_call.1} parent=1 // pred_region
      _
    $region29: #{tpu_custom_call.1} parent=1 // pred_fallthru
      _
    // Predicated region
    $region30: #{tpu_custom_call.1} parent=1 // pred_check
      _
    $region31: #{tpu_custom_call.1} parent=1 // pred_check_branch
      %31 = sbr.rel (0) target = $region33
    $region32: #{tpu_custom_call.1} parent=1 // pred_region
      _
    $region33: #{tpu_custom_call.1} parent=1 // pred_fallthru
      _
    // Predicated region
    $region34: #{tpu_custom_call.1} parent=1 // pred_check
      _
    $region35: #{tpu_custom_call.1} parent=1 // pred_check_branch
      %33 = sbr.rel (0) target = $region37
    $region36: #{tpu_custom_call.1} parent=1 // pred_region
      _
    $region37: #{tpu_custom_call.1} parent=1 // pred_fallthru
      _
    %v34 = vld [vmem:[%s0] sm:$0x3f]
    %v35 = vld [vmem:[%s1] sm:$0x3]
    %v36 = vld [vmem:[%s2] sm:$0xff]
    %v37 = vld [vmem:[%s2 + $0x8] sm:$0xff]
    %v38 = vld [vmem:[%s2 + $0x10] sm:$0xff]
    %v39 = vld [vmem:[%s2 + $0x18] sm:$0xff]
    %v40 = vld [vmem:[%s3] sm:$0xff]
    %v41 = vld [vmem:[%s3 + $0x8] sm:$0xff]
    %v42 = vld [vmem:[%s3 + $0x10] sm:$0xff]
    %v43 = vld [vmem:[%s3 + $0x18] sm:$0xff]
    %vm44 = vcmask 15360
    %v46 = vsel %vm44, %v40, 0
    %v49 = vsel %vm44, %v41, 0
    %v52 = vsel %vm44, %v42, 0
    %v55 = vsel %vm44, %v43, 0
    %vm57 = vcmask 1041408
    %v59 = vsel %vm57, %v35, 0
    %61 = vmatprep.subr.mxu0 0.0
    %62 = vmatpush1.msra.mxu0 %v59
    %63 = vmatprep.subr.mxu0 0.0
    %64 = vmatpush1.msra.mxu0 0.0
    %65 = vmatprep.subr.mxu0 0.0
    %66 = vmatpush1.msra.mxu0 0.0
    %67 = vmatprep.subr.mxu0 0.0
    %68 = vmatpush1.msra.mxu0 0.0
    %69 = vmatprep.subr.mxu0 0.0
    %70 = vmatpush1.msra.mxu0 0.0
    %71 = vmatprep.subr.mxu0 0.0
    %72 = vmatpush1.msra.mxu0 0.0
    %73 = vmatprep.subr.mxu0 0.0
    %74 = vmatpush1.msra.mxu0 0.0
    %75 = vmatprep.subr.mxu0 0.0
    %76 = vmatpush1.msra.mxu0 0.0
    %77 = vmatprep.subr.mxu0 0.0
    %78 = vmatpush1.msra.mxu0 0.0
    %79 = vmatprep.subr.mxu0 0.0
    %80 = vmatpush1.msra.mxu0 0.0
    %81 = vmatprep.subr.mxu0 0.0
    %82 = vmatpush1.msra.mxu0 0.0
    %83 = vmatprep.subr.mxu0 0.0
    %84 = vmatpush1.msra.mxu0 0.0
    %85 = vmatprep.subr.mxu0 0.0
    %86 = vmatpush1.msra.mxu0 0.0
    %87 = vmatprep.subr.mxu0 0.0
    %88 = vmatpush1.msra.mxu0 0.0
    %89 = vmatprep.subr.mxu0 0.0
    %90 = vmatpush1.msra.mxu0 0.0
    %91 = vmatprep.subr.mxu0 0.0
    %92 = vmatpush1.msra.mxu0 0.0
    %93 = vmatprep.subr.mxu0 0.0
    %94 = vmatpush1.msra.mxu0 0.0
    %95 = vmatprep.subr.mxu0 0.0
    %96 = vmatpush1.msra.mxu0 0.0
    %97 = vmatprep.subr.mxu0 0.0
    %98 = vmatpush1.msra.mxu0 0.0
    %99 = vmatprep.subr.mxu0 0.0
    %100 = vmatpush1.msra.mxu0 0.0
    %101 = vmatprep.subr.mxu0 0.0
    %102 = vmatpush1.msra.mxu0 0.0
    %103 = vmatprep.subr.mxu0 0.0
    %104 = vmatpush1.msra.mxu0 0.0
    %105 = vmatprep.subr.mxu0 0.0
    %106 = vmatpush1.msra.mxu0 0.0
    %107 = vmatprep.subr.mxu0 0.0
    %108 = vmatpush1.msra.mxu0 0.0
    %109 = vmatprep.subr.mxu0 0.0
    %110 = vmatpush1.msra.mxu0 0.0
    %111 = vmatprep.subr.mxu0 0.0
    %112 = vmatpush1.msra.mxu0 0.0
    %113 = vmatprep.subr.mxu0 0.0
    %114 = vmatpush1.msra.mxu0 0.0
    %115 = vmatprep.subr.mxu0 0.0
    %116 = vmatpush1.msra.mxu0 0.0
    %117 = vmatprep.subr.mxu0 0.0
    %118 = vmatpush1.msra.mxu0 0.0
    %119 = vmatprep.subr.mxu0 0.0
    %120 = vmatpush1.msra.mxu0 0.0
    %121 = vmatprep.subr.mxu0 0.0
    %122 = vmatpush1.msra.mxu0 0.0
    %123 = vmatprep.subr.mxu0 0.0
    %124 = vmatpush1.msra.mxu0 0.0
    %125 = vmatprep.mubr.f32.mxu0 0.0
    %126 = vmatmul.mubr.f32.gmra.mrb[0].mxu0 %v46
    %v127 = vpop.f32.mrb[0].mxu0
    %v128 = vadd.f32 0.0, %v127
    %v129 = vpop.f32.mrb[0].mxu0
    %130 = vmatprep.mubr.f32.mxu0 0.0
    %131 = vmatmul.mubr.f32.gmra.mrb[0].mxu0 %v49
    %v132 = vpop.f32.mrb[0].mxu0
    %v133 = vadd.f32 0.0, %v132
    %v134 = vpop.f32.mrb[0].mxu0
    %135 = vmatprep.mubr.f32.mxu0 0.0
    %136 = vmatmul.mubr.f32.gmra.mrb[0].mxu0 %v52
    %v137 = vpop.f32.mrb[0].mxu0
    %v138 = vadd.f32 0.0, %v137
    %v139 = vpop.f32.mrb[0].mxu0
    %140 = vmatprep.mubr.f32.mxu0 0.0
    %141 = vmatmul.mubr.f32.gmra.mrb[0].mxu0 %v55
    %v142 = vpop.f32.mrb[0].mxu0
    %v143 = vadd.f32 0.0, %v142
    %v144 = vpop.f32.mrb[0].mxu0
    %145 = vdwg.mxu0
    %vm146 = vcmask 48128
    %v148 = vsel %vm146, %v36, 0
    %v151 = vsel %vm146, %v37, 0
    %v154 = vsel %vm146, %v38, 0
    %v157 = vsel %vm146, %v39, 0
    %vm159 = vcmask 1045504
    %v161 = vsel %vm159, %v34, 0
    %163 = vmatprep.subr.mxu0 0.0
    %164 = vmatpush1.msra.mxu0 %v161
    %165 = vmatprep.subr.mxu0 0.0
    %166 = vmatpush1.msra.mxu0 0.0
    %167 = vmatprep.subr.mxu0 0.0
    %168 = vmatpush1.msra.mxu0 0.0
    %169 = vmatprep.subr.mxu0 0.0
    %170 = vmatpush1.msra.mxu0 0.0
    %171 = vmatprep.subr.mxu0 0.0
    %172 = vmatpush1.msra.mxu0 0.0
    %173 = vmatprep.subr.mxu0 0.0
    %174 = vmatpush1.msra.mxu0 0.0
    %175 = vmatprep.subr.mxu0 0.0
    %176 = vmatpush1.msra.mxu0 0.0
    %177 = vmatprep.subr.mxu0 0.0
    %178 = vmatpush1.msra.mxu0 0.0
    %179 = vmatprep.subr.mxu0 0.0
    %180 = vmatpush1.msra.mxu0 0.0
    %181 = vmatprep.subr.mxu0 0.0
    %182 = vmatpush1.msra.mxu0 0.0
    %183 = vmatprep.subr.mxu0 0.0
    %184 = vmatpush1.msra.mxu0 0.0
    %185 = vmatprep.subr.mxu0 0.0
    %186 = vmatpush1.msra.mxu0 0.0
    %187 = vmatprep.subr.mxu0 0.0
    %188 = vmatpush1.msra.mxu0 0.0
    %189 = vmatprep.subr.mxu0 0.0
    %190 = vmatpush1.msra.mxu0 0.0
    %191 = vmatprep.subr.mxu0 0.0
    %192 = vmatpush1.msra.mxu0 0.0
    %193 = vmatprep.subr.mxu0 0.0
    %194 = vmatpush1.msra.mxu0 0.0
    %195 = vmatprep.subr.mxu0 0.0
    %196 = vmatpush1.msra.mxu0 0.0
    %197 = vmatprep.subr.mxu0 0.0
    %198 = vmatpush1.msra.mxu0 0.0
    %199 = vmatprep.subr.mxu0 0.0
    %200 = vmatpush1.msra.mxu0 0.0
    %201 = vmatprep.subr.mxu0 0.0
    %202 = vmatpush1.msra.mxu0 0.0
    %203 = vmatprep.subr.mxu0 0.0
    %204 = vmatpush1.msra.mxu0 0.0
    %205 = vmatprep.subr.mxu0 0.0
    %206 = vmatpush1.msra.mxu0 0.0
    %207 = vmatprep.subr.mxu0 0.0
    %208 = vmatpush1.msra.mxu0 0.0
    %209 = vmatprep.subr.mxu0 0.0
    %210 = vmatpush1.msra.mxu0 0.0
    %211 = vmatprep.subr.mxu0 0.0
    %212 = vmatpush1.msra.mxu0 0.0
    %213 = vmatprep.subr.mxu0 0.0
    %214 = vmatpush1.msra.mxu0 0.0
    %215 = vmatprep.subr.mxu0 0.0
    %216 = vmatpush1.msra.mxu0 0.0
    %217 = vmatprep.subr.mxu0 0.0
    %218 = vmatpush1.msra.mxu0 0.0
    %219 = vmatprep.subr.mxu0 0.0
    %220 = vmatpush1.msra.mxu0 0.0
    %221 = vmatprep.subr.mxu0 0.0
    %222 = vmatpush1.msra.mxu0 0.0
    %223 = vmatprep.subr.mxu0 0.0
    %224 = vmatpush1.msra.mxu0 0.0
    %225 = vmatprep.subr.mxu0 0.0
    %226 = vmatpush1.msra.mxu0 0.0
    %227 = vmatprep.mubr.f32.mxu0 0.0
    %228 = vmatmul.mubr.f32.gmra.mrb[0].mxu0 %v148
    %v229 = vpop.f32.mrb[0].mxu0
    %v230 = vadd.f32 %v128, %v229
    %v231 = vpop.f32.mrb[0].mxu0
    %232 = vmatprep.mubr.f32.mxu0 0.0
    %233 = vmatmul.mubr.f32.gmra.mrb[0].mxu0 %v151
    %v234 = vpop.f32.mrb[0].mxu0
    %v235 = vadd.f32 %v133, %v234
    %v236 = vpop.f32.mrb[0].mxu0
    %237 = vmatprep.mubr.f32.mxu0 0.0
    %238 = vmatmul.mubr.f32.gmra.mrb[0].mxu0 %v154
    %v239 = vpop.f32.mrb[0].mxu0
    %v240 = vadd.f32 %v138, %v239
    %v241 = vpop.f32.mrb[0].mxu0
    %242 = vmatprep.mubr.f32.mxu0 0.0
    %243 = vmatmul.mubr.f32.gmra.mrb[0].mxu0 %v157
    %v244 = vpop.f32.mrb[0].mxu0
    %v245 = vadd.f32 %v143, %v244
    %v246 = vpop.f32.mrb[0].mxu0
    %247 = vdwg.mxu0
    %v248 = vld [vmem:[%s4] sm:$0xff]
    %v249 = vld [vmem:[%s4 + $0x8] sm:$0xff]
    %v250 = vld [vmem:[%s4 + $0x10] sm:$0xff]
    %v251 = vld [vmem:[%s4 + $0x18] sm:$0xff]
    %253 = vset.pattern.permute.xlu0 0
    %254 = vperm.xlu0 %253, %v248
    %v255 = vpop.permute.xlu0 %254
    %258 = vset.pattern.permute.xlu0 0
    %259 = vperm.xlu0 %258, %v249
    %v260 = vpop.permute.xlu0 %259
    %263 = vset.pattern.permute.xlu0 0
    %264 = vperm.xlu0 %263, %v250
    %v265 = vpop.permute.xlu0 %264
    %268 = vset.pattern.permute.xlu0 0
    %269 = vperm.xlu0 %268, %v251
    %v270 = vpop.permute.xlu0 %269
    %v272 = vadd.f32 %v230, %v255
    %v273 = vadd.f32 %v235, %v260
    %v274 = vadd.f32 %v240, %v265
    %v275 = vadd.f32 %v245, %v270
    %v276 = vmax.f32 %v272, 0.0
    %v277 = vmax.f32 %v273, 0.0
    %v278 = vmax.f32 %v274, 0.0
    %v279 = vmax.f32 %v275, 0.0
    %v280 = vld [vmem:[%s5] sm:$0xff]
    %v281 = vld [vmem:[%s5 + $0x8] sm:$0xff]
    %v282 = vld [vmem:[%s5 + $0x10] sm:$0xff]
    %v283 = vld [vmem:[%s5 + $0x18] sm:$0xff]
    %v284 = vld [vmem:[%s6] sm:$0xff]
    %v285 = vld [vmem:[%s6 + $0x8] sm:$0xff]
    %v286 = vld [vmem:[%s6 + $0x10] sm:$0xff]
    %v287 = vld [vmem:[%s6 + $0x18] sm:$0xff]
    %289 = vset.pattern.permute.xlu0 0
    %290 = vperm.xlu0 %289, %v284
    %v291 = vpop.permute.xlu0 %290
    %294 = vset.pattern.permute.xlu0 0
    %295 = vperm.xlu0 %294, %v285
    %v296 = vpop.permute.xlu0 %295
    %299 = vset.pattern.permute.xlu0 0
    %300 = vperm.xlu0 %299, %v286
    %v301 = vpop.permute.xlu0 %300
    %304 = vset.pattern.permute.xlu0 0
    %305 = vperm.xlu0 %304, %v287
    %v306 = vpop.permute.xlu0 %305
    %vm308 = vcmask 261120
    %v310 = vsel %vm308, %v280, 0
    %v313 = vsel %vm308, %v281, 0
    %v316 = vsel %vm308, %v282, 0
    %v319 = vsel %vm308, %v283, 0
    %321 = vmatprep.subr.mxu0 0.0
    %322 = vmatpush1.msra.mxu0 %v276
    %323 = vmatprep.subr.mxu0 0.0
    %324 = vmatpush1.msra.mxu0 %v277
    %325 = vmatprep.subr.mxu0 0.0
    %326 = vmatpush1.msra.mxu0 %v278
    %327 = vmatprep.subr.mxu0 0.0
    %328 = vmatpush1.msra.mxu0 %v279
    %329 = vmatprep.subr.mxu0 0.0
    %330 = vmatpush1.msra.mxu0 0.0
    %331 = vmatprep.subr.mxu0 0.0
    %332 = vmatpush1.msra.mxu0 0.0
    %333 = vmatprep.subr.mxu0 0.0
    %334 = vmatpush1.msra.mxu0 0.0
    %335 = vmatprep.subr.mxu0 0.0
    %336 = vmatpush1.msra.mxu0 0.0
    %337 = vmatprep.subr.mxu0 0.0
    %338 = vmatpush1.msra.mxu0 0.0
    %339 = vmatprep.subr.mxu0 0.0
    %340 = vmatpush1.msra.mxu0 0.0
    %341 = vmatprep.subr.mxu0 0.0
    %342 = vmatpush1.msra.mxu0 0.0
    %343 = vmatprep.subr.mxu0 0.0
    %344 = vmatpush1.msra.mxu0 0.0
    %345 = vmatprep.subr.mxu0 0.0
    %346 = vmatpush1.msra.mxu0 0.0
    %347 = vmatprep.subr.mxu0 0.0
    %348 = vmatpush1.msra.mxu0 0.0
    %349 = vmatprep.subr.mxu0 0.0
    %350 = vmatpush1.msra.mxu0 0.0
    %351 = vmatprep.subr.mxu0 0.0
    %352 = vmatpush1.msra.mxu0 0.0
    %353 = vmatprep.subr.mxu0 0.0
    %354 = vmatpush1.msra.mxu0 0.0
    %355 = vmatprep.subr.mxu0 0.0
    %356 = vmatpush1.msra.mxu0 0.0
    %357 = vmatprep.subr.mxu0 0.0
    %358 = vmatpush1.msra.mxu0 0.0
    %359 = vmatprep.subr.mxu0 0.0
    %360 = vmatpush1.msra.mxu0 0.0
    %361 = vmatprep.subr.mxu0 0.0
    %362 = vmatpush1.msra.mxu0 0.0
    %363 = vmatprep.subr.mxu0 0.0
    %364 = vmatpush1.msra.mxu0 0.0
    %365 = vmatprep.subr.mxu0 0.0
    %366 = vmatpush1.msra.mxu0 0.0
    %367 = vmatprep.subr.mxu0 0.0
    %368 = vmatpush1.msra.mxu0 0.0
    %369 = vmatprep.subr.mxu0 0.0
    %370 = vmatpush1.msra.mxu0 0.0
    %371 = vmatprep.subr.mxu0 0.0
    %372 = vmatpush1.msra.mxu0 0.0
    %373 = vmatprep.subr.mxu0 0.0
    %374 = vmatpush1.msra.mxu0 0.0
    %375 = vmatprep.subr.mxu0 0.0
    %376 = vmatpush1.msra.mxu0 0.0
    %377 = vmatprep.subr.mxu0 0.0
    %378 = vmatpush1.msra.mxu0 0.0
    %379 = vmatprep.subr.mxu0 0.0
    %380 = vmatpush1.msra.mxu0 0.0
    %381 = vmatprep.subr.mxu0 0.0
    %382 = vmatpush1.msra.mxu0 0.0
    %383 = vmatprep.subr.mxu0 0.0
    %384 = vmatpush1.msra.mxu0 0.0
    %385 = vmatprep.mubr.f32.mxu0 0.0
    %386 = vmatmul.mubr.f32.gmra.mrb[0].mxu0 %v310
    %v387 = vpop.f32.mrb[0].mxu0
    %v388 = vadd.f32 %v291, %v387
    %v389 = vpop.f32.mrb[0].mxu0
    %390 = vmatprep.mubr.f32.mxu0 0.0
    %391 = vmatmul.mubr.f32.gmra.mrb[0].mxu0 %v313
    %v392 = vpop.f32.mrb[0].mxu0
    %v393 = vadd.f32 %v296, %v392
    %v394 = vpop.f32.mrb[0].mxu0
    %395 = vmatprep.mubr.f32.mxu0 0.0
    %396 = vmatmul.mubr.f32.gmra.mrb[0].mxu0 %v316
    %v397 = vpop.f32.mrb[0].mxu0
    %v398 = vadd.f32 %v301, %v397
    %v399 = vpop.f32.mrb[0].mxu0
    %400 = vmatprep.mubr.f32.mxu0 0.0
    %401 = vmatmul.mubr.f32.gmra.mrb[0].mxu0 %v319
    %v402 = vpop.f32.mrb[0].mxu0
    %v403 = vadd.f32 %v306, %v402
    %v404 = vpop.f32.mrb[0].mxu0
    %405 = vdwg.mxu0
    %v406 = vmax.f32 %v388, 0.0
    %v407 = vmax.f32 %v393, 0.0
    %v408 = vmax.f32 %v398, 0.0
    %v409 = vmax.f32 %v403, 0.0
    %v410 = vld [vmem:[%s7] sm:$0x1]
    %s411 = sld [smem:[#allocation2]]
    %v412 = vstv %s411
    %v414 = vsel %vm308, %v410, 0
    %416 = vmatprep.subr.mxu0 0.0
    %417 = vmatpush1.msra.mxu0 %v406
    %418 = vmatprep.subr.mxu0 0.0
    %419 = vmatpush1.msra.mxu0 %v407
    %420 = vmatprep.subr.mxu0 0.0
    %421 = vmatpush1.msra.mxu0 %v408
    %422 = vmatprep.subr.mxu0 0.0
    %423 = vmatpush1.msra.mxu0 %v409
    %424 = vmatprep.subr.mxu0 0.0
    %425 = vmatpush1.msra.mxu0 0.0
    %426 = vmatprep.subr.mxu0 0.0
    %427 = vmatpush1.msra.mxu0 0.0
    %428 = vmatprep.subr.mxu0 0.0
    %429 = vmatpush1.msra.mxu0 0.0
    %430 = vmatprep.subr.mxu0 0.0
    %431 = vmatpush1.msra.mxu0 0.0
    %432 = vmatprep.subr.mxu0 0.0
    %433 = vmatpush1.msra.mxu0 0.0
    %434 = vmatprep.subr.mxu0 0.0
    %435 = vmatpush1.msra.mxu0 0.0
    %436 = vmatprep.subr.mxu0 0.0
    %437 = vmatpush1.msra.mxu0 0.0
    %438 = vmatprep.subr.mxu0 0.0
    %439 = vmatpush1.msra.mxu0 0.0
    %440 = vmatprep.subr.mxu0 0.0
    %441 = vmatpush1.msra.mxu0 0.0
    %442 = vmatprep.subr.mxu0 0.0
    %443 = vmatpush1.msra.mxu0 0.0
    %444 = vmatprep.subr.mxu0 0.0
    %445 = vmatpush1.msra.mxu0 0.0
    %446 = vmatprep.subr.mxu0 0.0
    %447 = vmatpush1.msra.mxu0 0.0
    %448 = vmatprep.subr.mxu0 0.0
    %449 = vmatpush1.msra.mxu0 0.0
    %450 = vmatprep.subr.mxu0 0.0
    %451 = vmatpush1.msra.mxu0 0.0
    %452 = vmatprep.subr.mxu0 0.0
    %453 = vmatpush1.msra.mxu0 0.0
    %454 = vmatprep.subr.mxu0 0.0
    %455 = vmatpush1.msra.mxu0 0.0
    %456 = vmatprep.subr.mxu0 0.0
    %457 = vmatpush1.msra.mxu0 0.0
    %458 = vmatprep.subr.mxu0 0.0
    %459 = vmatpush1.msra.mxu0 0.0
    %460 = vmatprep.subr.mxu0 0.0
    %461 = vmatpush1.msra.mxu0 0.0
    %462 = vmatprep.subr.mxu0 0.0
    %463 = vmatpush1.msra.mxu0 0.0
    %464 = vmatprep.subr.mxu0 0.0
    %465 = vmatpush1.msra.mxu0 0.0
    %466 = vmatprep.subr.mxu0 0.0
    %467 = vmatpush1.msra.mxu0 0.0
    %468 = vmatprep.subr.mxu0 0.0
    %469 = vmatpush1.msra.mxu0 0.0
    %470 = vmatprep.subr.mxu0 0.0
    %471 = vmatpush1.msra.mxu0 0.0
    %472 = vmatprep.subr.mxu0 0.0
    %473 = vmatpush1.msra.mxu0 0.0
    %474 = vmatprep.subr.mxu0 0.0
    %475 = vmatpush1.msra.mxu0 0.0
    %476 = vmatprep.subr.mxu0 0.0
    %477 = vmatpush1.msra.mxu0 0.0
    %478 = vmatprep.subr.mxu0 0.0
    %479 = vmatpush1.msra.mxu0 0.0
    %480 = vmatprep.mubr.f32.mxu0 0.0
    %481 = vmatmul.mubr.f32.gmra.mrb[0].mxu0 %v414
    %v482 = vpop.f32.mrb[0].mxu0
    %v483 = vadd.f32 %v412, %v482
    %v484 = vpop.f32.mrb[0].mxu0
    %485 = vdwg.mxu0
    %vm486 = vcmask 57344
    %487 = vst.msk [vmem:[#allocation3] sm:$0x1] %vm486, %v483
    // Predicated region
    $region38: #{tpu_custom_call.1} parent=1 // pred_check
      _
    $region39: #{tpu_custom_call.1} parent=1 // pred_check_branch
      %489 = sbr.rel (0) target = $region41
    $region40: #{tpu_custom_call.1} parent=1 // pred_region
      %s491 = ssub.s32 16, 16
      %492 = vsyncadd [#allocation4], %s491
      %s494 = sshll.u32 [#allocation3], 4
      %s495 = int_to_ptr.vmem [resolvable:$true] %s494
      %497 = dma.vmem_to_hbm [thread:$0]  %s495, 16, %s9, [#allocation4]
    $region41: #{tpu_custom_call.1} parent=1 // pred_fallthru
      _
    // Predicated region
    $region42: #{tpu_custom_call.1} parent=1 // pred_check
      _
    $region43: #{tpu_custom_call.1} parent=1 // pred_check_branch
      %499 = sbr.rel (0) target = $region45
    $region44: #{tpu_custom_call.1} parent=1 // pred_region
      %500 = dma.done [#allocation4], 16
    $region45: #{tpu_custom_call.1} parent=1 // pred_fallthru
      _
    %501 = vsyncpa [#allocation4], 1

</llo_original>
